<compile_context>
chip_gen: v6e
topology: v6e:2x2x1
jax: 0.10.0
libtpu: 0.0.40
codegen_flags: <defaults>
</compile_context>

<pallas_src>
import jax
import jax.numpy as jnp
from jax.experimental import pallas as pl
from jax.experimental.pallas import tpu as pltpu


def _round_up(x, m):
    return (x + m - 1) // m * m


def _make_outconv_kernel(c_in, use_mxu, precision):
    """Kernel for one (nb, C_in, t_hw) -> (nb, C_out, t_hw) tile."""

    def kernel(x_ref, w_ref, b_ref, o_ref):
        # x_ref: (nb, C_in, t)   w_ref: (C_out, C_in)   b_ref: (C_out, 1) f32
        if use_mxu:
            # nb == 1 on the MXU path (enforced by the wrapper).
            x = x_ref[0]                                    # (C_in, t)
            acc = jax.lax.dot_general(
                w_ref[...], x,
                (((1,), (0,)), ((), ())),
                preferred_element_type=jnp.float32,
                precision=precision)                        # (C_out, t)
            o_ref[0] = (acc + b_ref[...]).astype(o_ref.dtype)
        else:
            # Tiny channel count: unrolled per-channel FMA on the VPU with f32
            # accumulation.  Per-channel loads/casts keep f32 temporaries to a
            # single channel row at a time (important for bf16 inputs with
            # large lane tiles).
            wf = w_ref[...]                                 # (C_out, C_in) f32
            acc = None
            for ci in range(c_in):
                xi = x_ref[:, ci:ci + 1, :].astype(jnp.float32)  # (nb, 1, t)
                wi = wf[None, :, ci:ci + 1]                      # (1, C_out, 1)
                term = wi * xi                                   # (nb, C_out, t)
                acc = term if acc is None else acc + term
            o_ref[...] = (acc + b_ref[...][None]).astype(o_ref.dtype)

    return kernel


# VMEM budget for the double-buffered (input + output) tiles; fits every
# generation (v7x: 64 MiB physical / 32 MiB default scoped).
_VMEM_TILE_BUDGET = 16 * 1024 * 1024
# Per-grid-step HBM traffic target (MiB-scale amortizes the ~0.35us/step cost).
_TARGET_STEP_BYTES = 4 * 1024 * 1024
# Bound on total lanes per block (limits in-kernel f32 temporaries / vregs).
_MAX_BLOCK_LANES = 32768


def outconv_1x1(x_nchw, weight, bias):
    """1x1 Conv2d forward (== nn.Conv2d(C_in, C_out, kernel_size=1)).

    x_nchw: (N, C_in, H, W)
    weight: (C_out, C_in, 1, 1) or (C_out, C_in)
    bias:   (C_out,)
    returns (N, C_out, H, W), same dtype as x.
    """
    N, C_in, H, W = x_nchw.shape
    weight2d = weight.reshape(-1, C_in)                 # (C_out, C_in)
    C_out = weight2d.shape[0]
    HW = H * W

    # Views only -- no transpose / pad passes through HBM.
    x3d = x_nchw.reshape(N, C_in, HW)
    itemsize = jnp.dtype(x3d.dtype).itemsize

    # MXU only pays off with a non-trivial contraction AND enough output rows;
    # with C_out < 8 the MXU M-dim is mostly idle and the VPU FMA is free
    # filler under the DMA (the kernel is HBM-bound regardless).
    use_mxu = (C_in >= 32) and (C_out >= 8)
    precision = (jax.lax.Precision.HIGHEST
                 if x3d.dtype == jnp.float32 else None)
    w2d = weight2d.astype(x3d.dtype if use_mxu else jnp.float32)
    b2d = bias.reshape(C_out, 1).astype(jnp.float32)

    # ---- Block shape from VMEM budget + per-step-traffic target -------------
    sub = max(8, 32 // itemsize)                        # sublane pack: 8 f32, 16 bf16
    cin_pad = _round_up(C_in, sub)
    cout_pad = _round_up(C_out, sub)
    bytes_per_lane = (cin_pad + cout_pad) * itemsize    # in + out, one buffer

    lanes = min(_VMEM_TILE_BUDGET // (2 * bytes_per_lane),
                max(_TARGET_STEP_BYTES // bytes_per_lane, 128),
                _MAX_BLOCK_LANES)
    lanes = max(128, lanes // 128 * 128)

    hw_lanes = _round_up(HW, 128)
    if (not use_mxu) and N > 1 and hw_lanes <= lanes:
        # Small images: fold batch into the block (contiguous NCHW slab ->
        # one large DMA descriptor per step).
        nb = min(max(1, lanes // hw_lanes), N)
        if nb >= N:
            nb = pl.cdiv(N, 2)      # keep >=2 grid steps for v7x's 2 TCs
        t_hw = HW                   # full last dim: no (8,128) constraint
    else:
        nb = 1
        t_hw = min(lanes, hw_lanes)
        if N == 1 and t_hw >= hw_lanes and hw_lanes >= 256:
            t_hw = _round_up(pl.cdiv(HW, 2), 128)       # >=2 steps for v7x
    grid = (pl.cdiv(N, nb), pl.cdiv(HW, t_hw))

    # Explicit VMEM limit: the double-buffered tiles can exceed v5e's 16 MiB
    # default scoped limit; 32-48 MiB stays inside v7x's 64 MiB physical VMEM.
    tile_bytes = nb * (cin_pad + cout_pad) * _round_up(t_hw, 128) * itemsize
    vmem_limit = int(max(32 * 1024 * 1024,
                         min(48 * 1024 * 1024, 2 * tile_bytes + (8 << 20))))

    cost = pl.CostEstimate(
        flops=2 * N * HW * C_in * C_out,
        transcendentals=0,
        bytes_accessed=(N * C_in * HW * itemsize
                        + w2d.size * jnp.dtype(w2d.dtype).itemsize
                        + b2d.size * 4
                        + N * C_out * HW * itemsize),
    )

    out3d = pl.pallas_call(
        _make_outconv_kernel(C_in, use_mxu, precision),
        out_shape=jax.ShapeDtypeStruct((N, C_out, HW), x3d.dtype),
        grid_spec=pltpu.PrefetchScalarGridSpec(
            num_scalar_prefetch=0,
            grid=grid,
            in_specs=[
                # x tile: pixels on the lane axis, full channel extent.
                pl.BlockSpec((nb, C_in, t_hw), lambda i, j: (i, 0, j)),
                # Full weight / bias, resident across the whole grid.
                pl.BlockSpec((C_out, C_in), lambda i, j: (0, 0)),
                pl.BlockSpec((C_out, 1), lambda i, j: (0, 0)),
            ],
            out_specs=pl.BlockSpec((nb, C_out, t_hw), lambda i, j: (i, 0, j)),
        ),
        compiler_params=pltpu.CompilerParams(
            dimension_semantics=("parallel", "parallel"),
            vmem_limit_bytes=vmem_limit),
        cost_estimate=cost,
    )(x3d, w2d, b2d)

    return out3d.reshape(N, C_out, H, W)


if __name__ == "__main__":
    key = jax.random.PRNGKey(0)
    (k_x, k_w, k_b,
     k_x2, k_w2, k_b2,
     k_x3, k_w3, k_b3,
     k_x4) = jax.random.split(key, 10)

    def ref_conv(x, w, b):
        c_out, c_in = w.shape[0], w.shape[1]
        return (jnp.einsum("nchw,oc->nohw",
                           x.astype(jnp.float32), w.reshape(c_out, c_in))
                + b[None, :, None, None])

    # --- Primary OutConv test: N=2, C_in=4, C_out=3, 16x16, f32 (VPU path) ---
    N, C_in, C_out, H, W = 2, 4, 3, 16, 16
    x = jax.random.normal(k_x, (N, C_in, H, W), dtype=jnp.float32)
    weight = jax.random.normal(k_w, (C_out, C_in, 1, 1), dtype=jnp.float32) * 0.1
    bias = jax.random.normal(k_b, (C_out,), dtype=jnp.float32) * 0.1
    y = jax.block_until_ready(outconv_1x1(x, weight, bias))
    assert y.shape == (N, C_out, H, W)
    assert jnp.allclose(y, ref_conv(x, weight, bias), atol=1e-5, rtol=1e-5)

    # --- Batch-folding path: many small images in one block (nb > 1) ---------
    xf = jax.random.normal(k_x4, (8, 4, 8, 8), dtype=jnp.float32)
    yf = jax.block_until_ready(outconv_1x1(xf, weight, bias))
    assert jnp.allclose(yf, ref_conv(xf, weight, bias), atol=1e-5, rtol=1e-5)

    # --- Edge test: H*W not a multiple of 128 (masked lane tail) -------------
    xe = jax.random.normal(k_x2, (1, 5, 10, 10), dtype=jnp.float32)
    we = jax.random.normal(k_w2, (3, 5, 1, 1), dtype=jnp.float32) * 0.1
    be = jax.random.normal(k_b2, (3,), dtype=jnp.float32) * 0.1
    ye = jax.block_until_ready(outconv_1x1(xe, we, be))
    assert jnp.allclose(ye, ref_conv(xe, we, be), atol=1e-5, rtol=1e-5)

    # --- Larger-channel test exercising the MXU path -------------------------
    xm = jax.random.normal(k_x3, (2, 32, 16, 16), dtype=jnp.float32)
    wm = jax.random.normal(k_w3, (16, 32, 1, 1), dtype=jnp.float32) * 0.1
    bm = jax.random.normal(k_b3, (16,), dtype=jnp.float32) * 0.1
    ym = jax.block_until_ready(outconv_1x1(xm, wm, bm))
    # Loose tol: reference einsum uses default (bf16-pass) matmul precision.
    assert jnp.allclose(ym, ref_conv(xm, wm, bm), atol=2e-2, rtol=2e-2)

    # --- bf16 input/output streams (halves HBM traffic); f32 accumulation ----
    xb = x.astype(jnp.bfloat16)
    yb = jax.block_until_ready(outconv_1x1(xb, weight, bias))
    assert yb.dtype == jnp.bfloat16
    assert jnp.allclose(yb.astype(jnp.float32), ref_conv(xb, weight, bias),
                        atol=2e-2, rtol=2e-2)

    print("KERNEL_OK")
</pallas_src>

<mosaic_0001>
module attributes {stable_mosaic.version = 11 : i64} {
  func.func @kernel(%arg0: i32, %arg1: i32, %arg2: memref<1x4x256xf32, #tpu.memory_space<vmem>>, %arg3: memref<3x4xf32, #tpu.memory_space<vmem>>, %arg4: memref<3x1xf32, #tpu.memory_space<vmem>>, %arg5: memref<1x3x256xf32, #tpu.memory_space<vmem>>) attributes {dimension_semantics = [#tpu.dimension_semantics<parallel>, #tpu.dimension_semantics<parallel>], iteration_bounds = array<i64: 2, 1>, scalar_prefetch = 0 : i64, scratch_operands = 0 : i64, tpu.core_type = #tpu.core_type<tc>, window_params = [{transform_indices = @transform_0, window_bounds = array<i64: 1, 4, 256>}, {pipeline_mode = #tpu.pipeline_mode<synchronous>, transform_indices = @transform_1, window_bounds = array<i64: 3, 4>}, {pipeline_mode = #tpu.pipeline_mode<synchronous>, transform_indices = @transform_2, window_bounds = array<i64: 3, 1>}, {transform_indices = @transform_3, window_bounds = array<i64: 1, 3, 256>}]} {
    %c0 = arith.constant 0 : index
    %c0_0 = arith.constant 0 : index
    %0 = vector.load %arg3[%c0, %c0_0] : memref<3x4xf32, #tpu.memory_space<vmem>>, vector<3x4xf32>
    %c0_1 = arith.constant 0 : index
    %c0_2 = arith.constant 0 : index
    %c0_3 = arith.constant 0 : index
    %1 = vector.load %arg2[%c0_1, %c0_2, %c0_3] : memref<1x4x256xf32, #tpu.memory_space<vmem>>, vector<1x1x256xf32>
    %2 = vector.extract_strided_slice %0 {offsets = [0, 0], sizes = [3, 1], strides = [1, 1]} : vector<3x4xf32> to vector<3x1xf32>
    %3 = vector.shape_cast %2 : vector<3x1xf32> to vector<1x3x1xf32>
    %4 = vector.broadcast %3 : vector<1x3x1xf32> to vector<1x3x256xf32>
    %5 = vector.broadcast %1 : vector<1x1x256xf32> to vector<1x3x256xf32>
    %6 = arith.mulf %4, %5 : vector<1x3x256xf32>
    %c0_4 = arith.constant 0 : index
    %c1 = arith.constant 1 : index
    %c0_5 = arith.constant 0 : index
    %7 = vector.load %arg2[%c0_4, %c1, %c0_5] : memref<1x4x256xf32, #tpu.memory_space<vmem>>, vector<1x1x256xf32>
    %8 = vector.extract_strided_slice %0 {offsets = [0, 1], sizes = [3, 1], strides = [1, 1]} : vector<3x4xf32> to vector<3x1xf32>
    %9 = vector.shape_cast %8 : vector<3x1xf32> to vector<1x3x1xf32>
    %10 = vector.broadcast %9 : vector<1x3x1xf32> to vector<1x3x256xf32>
    %11 = vector.broadcast %7 : vector<1x1x256xf32> to vector<1x3x256xf32>
    %12 = arith.mulf %10, %11 : vector<1x3x256xf32>
    %13 = arith.addf %6, %12 : vector<1x3x256xf32>
    %c0_6 = arith.constant 0 : index
    %c2 = arith.constant 2 : index
    %c0_7 = arith.constant 0 : index
    %14 = vector.load %arg2[%c0_6, %c2, %c0_7] : memref<1x4x256xf32, #tpu.memory_space<vmem>>, vector<1x1x256xf32>
    %15 = vector.extract_strided_slice %0 {offsets = [0, 2], sizes = [3, 1], strides = [1, 1]} : vector<3x4xf32> to vector<3x1xf32>
    %16 = vector.shape_cast %15 : vector<3x1xf32> to vector<1x3x1xf32>
    %17 = vector.broadcast %16 : vector<1x3x1xf32> to vector<1x3x256xf32>
    %18 = vector.broadcast %14 : vector<1x1x256xf32> to vector<1x3x256xf32>
    %19 = arith.mulf %17, %18 : vector<1x3x256xf32>
    %20 = arith.addf %13, %19 : vector<1x3x256xf32>
    %c0_8 = arith.constant 0 : index
    %c3 = arith.constant 3 : index
    %c0_9 = arith.constant 0 : index
    %21 = vector.load %arg2[%c0_8, %c3, %c0_9] : memref<1x4x256xf32, #tpu.memory_space<vmem>>, vector<1x1x256xf32>
    %22 = vector.extract_strided_slice %0 {offsets = [0, 3], sizes = [3, 1], strides = [1, 1]} : vector<3x4xf32> to vector<3x1xf32>
    %23 = vector.shape_cast %22 : vector<3x1xf32> to vector<1x3x1xf32>
    %24 = vector.broadcast %23 : vector<1x3x1xf32> to vector<1x3x256xf32>
    %25 = vector.broadcast %21 : vector<1x1x256xf32> to vector<1x3x256xf32>
    %26 = arith.mulf %24, %25 : vector<1x3x256xf32>
    %27 = arith.addf %20, %26 : vector<1x3x256xf32>
    %c0_10 = arith.constant 0 : index
    %c0_11 = arith.constant 0 : index
    %28 = vector.load %arg4[%c0_10, %c0_11] : memref<3x1xf32, #tpu.memory_space<vmem>>, vector<3x1xf32>
    %29 = vector.shape_cast %28 : vector<3x1xf32> to vector<1x3x1xf32>
    %30 = vector.broadcast %29 : vector<1x3x1xf32> to vector<1x3x256xf32>
    %31 = arith.addf %27, %30 : vector<1x3x256xf32>
    %c0_12 = arith.constant 0 : index
    %c0_13 = arith.constant 0 : index
    %c0_14 = arith.constant 0 : index
    %32 = vector.load %arg5[%c0_12, %c0_13, %c0_14] : memref<1x3x256xf32, #tpu.memory_space<vmem>>, vector<1x3x256xf32>
    tpu.vector_store %arg5[%c0_12, %c0_13, %c0_14], %31 {strides = array<i32>} : memref<1x3x256xf32, #tpu.memory_space<vmem>>, vector<1x3x256xf32>,
    return
  }
  func.func @transform_0(%arg0: i32, %arg1: i32) -> (i32, i32, i32) {
    %c0_i32 = arith.constant 0 : i32
    %c0_i32_0 = arith.constant 0 : i32
    return %arg0, %c0_i32, %arg1 : i32, i32, i32
  }
  func.func @transform_1(%arg0: i32, %arg1: i32) -> (i32, i32) {
    %c0_i32 = arith.constant 0 : i32
    %c0_i32_0 = arith.constant 0 : i32
    %c0_i32_1 = arith.constant 0 : i32
    return %c0_i32, %c0_i32_0 : i32, i32
  }
  func.func @transform_2(%arg0: i32, %arg1: i32) -> (i32, i32) {
    %c0_i32 = arith.constant 0 : i32
    %c0_i32_0 = arith.constant 0 : i32
    %c0_i32_1 = arith.constant 0 : i32
    return %c0_i32, %c0_i32_0 : i32, i32
  }
  func.func @transform_3(%arg0: i32, %arg1: i32) -> (i32, i32, i32) {
    %c0_i32 = arith.constant 0 : i32
    %c0_i32_0 = arith.constant 0 : i32
    return %arg0, %c0_i32, %arg1 : i32, i32, i32
  }
}

</mosaic_0001>

<llo_original>
// kernel: tpu_custom_call.1
$region0: #{tpu_custom_call.1}
  #allocation0 [shape = 'u32[]', space=smem, size = 0x4, offset = 0x4, fixed_abs, tag = 'smem constant byte address 0x4 - core index']
  #allocation1 [shape = 'u32[144,128]{1,0:T(1,128)}', space=vmem, size = 0x12000, scoped, tag = 'internal scratch']
  %s0 = inlined_call_operand.hbm [shape: f32[2,4,256], index: 0, kind: input, shape index: {}]
  %s1 = inlined_call_operand.vmem [shape: f32[3,4], index: 1, kind: input, shape index: {}]
  %s2 = inlined_call_operand.vmem [shape: f32[3,1], index: 2, kind: input, shape index: {}]
  %s3 = inlined_call_operand.vmem [shape: f32[2,3,256], index: 3, kind: output, shape index: {}]
  %s4 = sld [smem:[#allocation0]]
  $region49: #{tpu_custom_call.1} parent=0
    _
  %s6 = ssub.s32 1, %s4
  %s7 = scalar_select 0, %s6, %s4
  $region1: #{tpu_custom_call.1} parent=0
    #allocation2 [shape = 'u8[8192]{0}', space=vmem, size = 0x2000, scoped, tag = 'input window, operand 0']
    #allocation3 [shape = 's32[2]{0}', space=sflag, size = 0x8, scoped, tag = 'scoped memory for tpu_custom_call.1']
    %8 = vsyncpa [#allocation3], 0
    %s9 = scalar_lea.sflag [#allocation3], 1
    %10 = vsyncpa %s9, 0
    loop: start=0, step=1, limit=4
    $region2: #{tpu_custom_call.1} parent=1 // loop_pre_header
      _
    $region3: #{tpu_custom_call.1} parent=1 // loop_header
      %s12 = sphi 0, %s16
      %p13 = scmp.ge.s32.totalorder %s12, 4
      %s19 = sphi 0, %s31
      %s20 = sphi 0, %s27
      %s21 = sphi 0, %s19
      %s22 = sphi 0, %s20
      %s23 = sphi 0, %s21
      %s24 = sphi 0, %s22
      %s36 = sphi 0, %s38
      %s39 = sphi 0, %s36
      %s40 = sphi 0, %s39
      %s56 = sphi 0, %s40
      %s60 = sphi 0, %s60
      %s62 = sphi 0, %s60
      %s63 = sphi 0, %s62
      %s77 = sphi 0, %s63
      %s81 = sphi 0, %s81
      %s83 = sphi 0, %s81
      %s84 = sphi 0, %s83
      %s98 = sphi 0, %s84
      %s106 = sphi 0, %s108
      %s109 = sphi 0, %s106
      %s110 = sphi 0, %s109
      %s126 = sphi 0, %s110
    $region4: #{tpu_custom_call.1} parent=1 // loop_header_branch
      %15 = sbr.rel (%p13) target = $region8
    $region5: #{tpu_custom_call.1} parent=1 // loop_body
      %s17 = ssub.s32 %s12, 1
      %s18 = ssub.s32 %s12, 2
      %s25 = sadd.s32 1, %s20
      %p26 = scmp.ge.s32.totalorder %s25, 1
      %s27 = scalar_select %p26, 0, %s25
      %s28 = sadd.s32 1, %s19
      %s29 = scalar_select %p26, %s28, %s19
      %p30 = scmp.ge.s32.totalorder %s29, 2
      %s31 = scalar_select %p30, 0, %s29
      %s32 = ssub.s32 %s19, %s31
      %s33 = ssub.s32 %s20, %s27
      %s34 = sor.u32 %s32, %s33
      %p35 = scmp.eq.s32.totalorder %s34, 0
      %s37 = sadd.s32 %s36, 1
      %s38 = scalar_select %p35, %s36, %s37
      %p41 = pneg %p35
      %p42 = scmp.eq.s32.totalorder %s12, 1
      %p43 = por %p41, %p42
      %p44 = scmp.ne.s32.totalorder %s36, %s39
      %p45 = scmp.eq.s32.totalorder %s12, 0
      %p46 = por %p44, %p45
      %p47 = scmp.ne.s32.totalorder %s36, %s39
      %p48 = scmp.eq.s32.totalorder %s17, 1
      %p49 = por %p47, %p48
      %p50 = scmp.ne.s32.totalorder %s39, %s40
      %p51 = scmp.eq.s32.totalorder %s17, 0
      %p52 = por %p50, %p51
      %p53 = scmp.ne.s32.totalorder %s39, %s40
      %p54 = scmp.eq.s32.totalorder %s18, 1
      %p55 = por %p53, %p54
      %p57 = scmp.ne.s32.totalorder %s40, %s56
      %p58 = scmp.eq.s32.totalorder %s18, 0
      %p59 = por %p57, %p58
      %s61 = sadd.s32 %s60, 1
      %p64 = scmp.eq.s32.totalorder %s12, 1
      %p65 = scmp.ne.s32.totalorder %s60, %s62
      %p66 = scmp.eq.s32.totalorder %s12, 0
      %p67 = por %p65, %p66
      %p68 = scmp.ne.s32.totalorder %s60, %s62
      %p69 = scmp.eq.s32.totalorder %s17, 1
      %p70 = por %p68, %p69
      %p71 = scmp.ne.s32.totalorder %s62, %s63
      %p72 = scmp.eq.s32.totalorder %s17, 0
      %p73 = por %p71, %p72
      %p74 = scmp.ne.s32.totalorder %s62, %s63
      %p75 = scmp.eq.s32.totalorder %s18, 1
      %p76 = por %p74, %p75
      %p78 = scmp.ne.s32.totalorder %s63, %s77
      %p79 = scmp.eq.s32.totalorder %s18, 0
      %p80 = por %p78, %p79
      %s82 = sadd.s32 %s81, 1
      %p85 = scmp.eq.s32.totalorder %s12, 1
      %p86 = scmp.ne.s32.totalorder %s81, %s83
      %p87 = scmp.eq.s32.totalorder %s12, 0
      %p88 = por %p86, %p87
      %p89 = scmp.ne.s32.totalorder %s81, %s83
      %p90 = scmp.eq.s32.totalorder %s17, 1
      %p91 = por %p89, %p90
      %p92 = scmp.ne.s32.totalorder %s83, %s84
      %p93 = scmp.eq.s32.totalorder %s17, 0
      %p94 = por %p92, %p93
      %p95 = scmp.ne.s32.totalorder %s83, %s84
      %p96 = scmp.eq.s32.totalorder %s18, 1
      %p97 = por %p95, %p96
      %p99 = scmp.ne.s32.totalorder %s84, %s98
      %p100 = scmp.eq.s32.totalorder %s18, 0
      %p101 = por %p99, %p100
      %s102 = ssub.s32 %s19, %s31
      %s103 = ssub.s32 %s20, %s27
      %s104 = sor.u32 %s102, %s103
      %p105 = scmp.eq.s32.totalorder %s104, 0
      %s107 = sadd.s32 %s106, 1
      %s108 = scalar_select %p105, %s106, %s107
      %p111 = pneg %p105
      %p112 = scmp.eq.s32.totalorder %s12, 1
      %p113 = por %p111, %p112
      %p114 = scmp.ne.s32.totalorder %s106, %s109
      %p115 = scmp.eq.s32.totalorder %s12, 0
      %p116 = por %p114, %p115
      %p117 = scmp.ne.s32.totalorder %s106, %s109
      %p118 = scmp.eq.s32.totalorder %s17, 1
      %p119 = por %p117, %p118
      %p120 = scmp.ne.s32.totalorder %s109, %s110
      %p121 = scmp.eq.s32.totalorder %s17, 0
      %p122 = por %p120, %p121
      %p123 = scmp.ne.s32.totalorder %s109, %s110
      %p124 = scmp.eq.s32.totalorder %s18, 1
      %p125 = por %p123, %p124
      %p127 = scmp.ne.s32.totalorder %s110, %s126
      %p128 = scmp.eq.s32.totalorder %s18, 0
      %p129 = por %p127, %p128
      %p130 = scmp.le.s32.totalorder 1, %s12
      %p131 = scmp.lt.s32.totalorder %s12, 3
      %p132 = pnand %p130, %p131
      %p133 = pneg %p132
      // Predicated region
      $region9: #{tpu_custom_call.1} parent=5 // pred_check
        _
      $region10: #{tpu_custom_call.1} parent=5 // pred_check_branch
        %135 = sbr.rel (%p132) target = $region12
      $region11: #{tpu_custom_call.1} parent=5 // pred_region
        %s136 = ssub.s32 %s12, 1
        // Predicated region
        $region13: #{tpu_custom_call.1} parent=11 // pred_check
          %p137 = pneg %p73
        $region14: #{tpu_custom_call.1} parent=11 // pred_check_branch
          %139 = sbr.rel (%p137) target = $region16
        $region15: #{tpu_custom_call.1} parent=11 // pred_region
          _
        $region16: #{tpu_custom_call.1} parent=11 // pred_fallthru
          _
        // Predicated region
        $region17: #{tpu_custom_call.1} parent=11 // pred_check
          %p140 = pneg %p94
        $region18: #{tpu_custom_call.1} parent=11 // pred_check_branch
          %142 = sbr.rel (%p140) target = $region20
        $region19: #{tpu_custom_call.1} parent=11 // pred_region
          _
        $region20: #{tpu_custom_call.1} parent=11 // pred_fallthru
          _
      $region12: #{tpu_custom_call.1} parent=5 // pred_fallthru
        _
      %p143 = scmp.lt.s32.totalorder %s12, 2
      // Predicated region
      $region21: #{tpu_custom_call.1} parent=5 // pred_check
        %p144 = pneg %p143
      $region22: #{tpu_custom_call.1} parent=5 // pred_check_branch
        %146 = sbr.rel (%p144) target = $region24
      $region23: #{tpu_custom_call.1} parent=5 // pred_region
        // Predicated region
        $region25: #{tpu_custom_call.1} parent=23 // pred_check
          %p147 = pneg %p46
        $region26: #{tpu_custom_call.1} parent=23 // pred_check_branch
          %149 = sbr.rel (%p147) target = $region28
        $region27: #{tpu_custom_call.1} parent=23 // pred_region
          %s150 = sand.u32 %s36, 1
          %s151 = scalar_lea.sflag [#allocation3], %s150
          %s152 = sand.u32 %s36, 1
          %s153 = smul.addr %s152, 8
          %s154 = scalar_lea.vmem [#allocation2], %s153
          %s155 = smul.u32 2, %s20
          %s157 = ssub.s32 128, 128
          %158 = vsyncadd %s151, %s157
          %s159 = smul.addr %s19, 2
          %s160 = sadd.s32 %s155, %s159
          %s161 = smul.addr %s160, 64
          %s162 = scalar_lea.hbm %s0, %s161
          %s164 = sshll.u32 %s154, 4
          %s165 = int_to_ptr.vmem [resolvable:$true] %s164
          %167 = dma.hbm_to_vmem [thread:$0]  %s162, 128, %s165, %s151
        $region28: #{tpu_custom_call.1} parent=23 // pred_fallthru
          _
      $region24: #{tpu_custom_call.1} parent=5 // pred_fallthru
        _
      %p168 = scmp.le.s32.totalorder 1, %s12
      %p169 = scmp.lt.s32.totalorder %s12, 3
      %p170 = pnand %p168, %p169
      %p171 = pneg %p170
      // Predicated region
      $region29: #{tpu_custom_call.1} parent=5 // pred_check
        _
      $region30: #{tpu_custom_call.1} parent=5 // pred_check_branch
        %173 = sbr.rel (%p170) target = $region32
      $region31: #{tpu_custom_call.1} parent=5 // pred_region
        %s174 = ssub.s32 %s12, 1
        %s175 = sand.u32 %s39, 1
        %s176 = scalar_lea.sflag [#allocation3], %s175
        %s177 = sand.u32 %s39, 1
        %s178 = smul.addr %s177, 8
        %s179 = scalar_lea.vmem [#allocation2], %s178
        // Predicated region
        $region33: #{tpu_custom_call.1} parent=31 // pred_check
          %p180 = pneg %p52
        $region34: #{tpu_custom_call.1} parent=31 // pred_check_branch
          %182 = sbr.rel (%p180) target = $region36
        $region35: #{tpu_custom_call.1} parent=31 // pred_region
          %183 = dma.done %s176, 128
        $region36: #{tpu_custom_call.1} parent=31 // pred_fallthru
          _
        %s184 = sand.u32 %s39, 1
        %s185 = scalar_lea.sflag [#allocation3], %s184
        %s186 = sand.u32 %s39, 1
        %s187 = smul.addr %s186, 8
        %s188 = scalar_lea.vmem [#allocation2], %s187
        %p189 = pneg %p52
        %p190 = pneg %p49
        %p191 = pneg %p73
        %p192 = pneg %p70
        %p193 = pneg %p94
        %p194 = pneg %p91
        %p195 = pneg %p122
        %p196 = pneg %p119
        %s197 = smul.u32 2, %s22
        %p198 = scmp.lt.s32.totalorder %s21, 1
        %s199 = scalar_select %p198, %s21, 1
        %p200 = scmp.lt.s32.totalorder %s197, 1
        %s201 = scalar_select %p200, %s197, 1
        %s202 = smul.addr %s199, 2
        %s203 = sadd.s32 %s201, %s202
        %s204 = smul.addr %s203, 4
        %s205 = scalar_lea.vmem %s3, %s204
        %s206 = smul.u32 2, %s22
        %s207 = smul.u32 2, %s22
        %p208 = scmp.lt.s32.totalorder %s21, 1
        %s209 = scalar_select %p208, %s21, 1
        %p210 = scmp.lt.s32.totalorder %s207, 1
        %s211 = scalar_select %p210, %s207, 1
        %s212 = smul.addr %s209, 2
        %s213 = sadd.s32 %s211, %s212
        %s214 = smul.addr %s213, 4
        %s215 = scalar_lea.vmem %s3, %s214
        %s216 = smul.u32 2, %s22
        %v217 = vld [vmem:[%s1] sm:$0x7]
        %v218 = vld [vmem:[%s179] ss:$4 sm:$0x3]
        %220 = vset.pattern.permute.xlu0 0
        %221 = vperm.xlu0 %220, %v217
        %v222 = vpop.permute.xlu0 %221
        %v225 = vlaneseq
        %v226 = vshrl.u32 %v225, 7
        %v227 = vsub.s32 0, %v226
        %v228 = vrot.slane %v218, %v227
        %v229 = vlaneseq
        %v230 = vshrl.u32 %v229, 7
        %v231 = vsub.s32 1, %v230
        %v232 = vrot.slane %v218, %v231
        %v235 = vmul.f32 %v222, %v228
        %v236 = vmul.f32 %v222, %v232
        %s237 = scalar_lea.vmem %s179, 1 [#allocation2]
        %v238 = vld [vmem:[%s237] ss:$4 sm:$0x3]
        %239 = vset.pattern.permute.xlu0 1
        %240 = vperm.xlu0 %239, %v217
        %v241 = vpop.permute.xlu0 %240
        %v244 = vlaneseq
        %v245 = vshrl.u32 %v244, 7
        %v246 = vsub.s32 0, %v245
        %v247 = vrot.slane %v238, %v246
        %v248 = vlaneseq
        %v249 = vshrl.u32 %v248, 7
        %v250 = vsub.s32 1, %v249
        %v251 = vrot.slane %v238, %v250
        %v254 = vmul.f32 %v241, %v247
        %v255 = vmul.f32 %v241, %v251
        %v256 = vadd.f32 %v235, %v254
        %v257 = vadd.f32 %v236, %v255
        %s258 = scalar_lea.vmem %s179, 2 [#allocation2]
        %v259 = vld [vmem:[%s258] ss:$4 sm:$0x3]
        %260 = vset.pattern.permute.xlu0 2
        %261 = vperm.xlu0 %260, %v217
        %v262 = vpop.permute.xlu0 %261
        %v265 = vlaneseq
        %v266 = vshrl.u32 %v265, 7
        %v267 = vsub.s32 0, %v266
        %v268 = vrot.slane %v259, %v267
        %v269 = vlaneseq
        %v270 = vshrl.u32 %v269, 7
        %v271 = vsub.s32 1, %v270
        %v272 = vrot.slane %v259, %v271
        %v275 = vmul.f32 %v262, %v268
        %v276 = vmul.f32 %v262, %v272
        %v277 = vadd.f32 %v256, %v275
        %v278 = vadd.f32 %v257, %v276
        %s279 = scalar_lea.vmem %s179, 3 [#allocation2]
        %v280 = vld [vmem:[%s279] ss:$4 sm:$0x3]
        %281 = vset.pattern.permute.xlu0 3
        %282 = vperm.xlu0 %281, %v217
        %v283 = vpop.permute.xlu0 %282
        %v286 = vlaneseq
        %v287 = vshrl.u32 %v286, 7
        %v288 = vsub.s32 0, %v287
        %v289 = vrot.slane %v280, %v288
        %v290 = vlaneseq
        %v291 = vshrl.u32 %v290, 7
        %v292 = vsub.s32 1, %v291
        %v293 = vrot.slane %v280, %v292
        %v296 = vmul.f32 %v283, %v289
        %v297 = vmul.f32 %v283, %v293
        %v298 = vadd.f32 %v277, %v296
        %v299 = vadd.f32 %v278, %v297
        %v300 = vld [vmem:[%s2] sm:$0x7]
        %302 = vset.pattern.permute.xlu0 0
        %303 = vperm.xlu0 %302, %v300
        %v304 = vpop.permute.xlu0 %303
        %v306 = vadd.f32 %v298, %v304
        %v307 = vadd.f32 %v299, %v304
        %v310 = vcombine.low %v306, %v307
        %312 = vst [vmem:[%s215] sm:$0x77] %v310
        %s313 = smul.u32 2, %s22
        %p314 = scmp.lt.s32.totalorder %s21, 1
        %s315 = scalar_select %p314, %s21, 1
        %p316 = scmp.lt.s32.totalorder %s313, 1
        %s317 = scalar_select %p316, %s313, 1
        %s318 = smul.addr %s315, 2
        %s319 = sadd.s32 %s317, %s318
        %s320 = smul.addr %s319, 4
        %s321 = scalar_lea.vmem %s3, %s320
        // Predicated region
        $region37: #{tpu_custom_call.1} parent=31 // pred_check
          %p322 = pneg %p119
        $region38: #{tpu_custom_call.1} parent=31 // pred_check_branch
          %324 = sbr.rel (%p322) target = $region40
        $region39: #{tpu_custom_call.1} parent=31 // pred_region
          %s325 = smul.u32 2, %s22
        $region40: #{tpu_custom_call.1} parent=31 // pred_fallthru
          _
      $region32: #{tpu_custom_call.1} parent=5 // pred_fallthru
        _
      %p326 = scmp.le.s32.totalorder 2, %s12
      // Predicated region
      $region41: #{tpu_custom_call.1} parent=5 // pred_check
        %p327 = pneg %p326
      $region42: #{tpu_custom_call.1} parent=5 // pred_check_branch
        %329 = sbr.rel (%p327) target = $region44
      $region43: #{tpu_custom_call.1} parent=5 // pred_region
        %s330 = ssub.s32 %s12, 2
        // Predicated region
        $region45: #{tpu_custom_call.1} parent=43 // pred_check
          %p331 = pneg %p125
        $region46: #{tpu_custom_call.1} parent=43 // pred_check_branch
          %333 = sbr.rel (%p331) target = $region48
        $region47: #{tpu_custom_call.1} parent=43 // pred_region
          %s334 = smul.u32 2, %s24
          %p335 = scmp.lt.s32.totalorder %s23, 1
          %s336 = scalar_select %p335, %s23, 1
          %p337 = scmp.lt.s32.totalorder %s334, 1
          %s338 = scalar_select %p337, %s334, 1
          %s339 = smul.addr %s336, 2
          %s340 = sadd.s32 %s338, %s339
          %s341 = smul.addr %s340, 4
          %s342 = scalar_lea.vmem %s3, %s341
        $region48: #{tpu_custom_call.1} parent=43 // pred_fallthru
          _
      $region44: #{tpu_custom_call.1} parent=5 // pred_fallthru
        _
    $region6: #{tpu_custom_call.1} parent=1 // loop_footer
      %s16 = sadd.s32 1, %s12
    $region7: #{tpu_custom_call.1} parent=1 // loop_footer_branch
      %11 = sbr.rel target = $region3
    $region8: #{tpu_custom_call.1} parent=1 // loop_exit
      _
    %343 = vsyncpa [#allocation3], 1
    %s344 = scalar_lea.sflag [#allocation3], 1
    %345 = vsyncpa %s344, 1

</llo_original>
